<compile_context>
chip_gen: v6e
topology: v6e:2x2x1
jax: 0.10.0
libtpu: 0.0.40
codegen_flags: <defaults>
</compile_context>

<pallas_src>
import math

import jax
import jax.numpy as jnp
from jax.experimental import pallas as pl
from jax.experimental.pallas import tpu as pltpu

D = 10            # dice dimension
EMB = 32          # emb_size (small for the demo; module default is 1024)
MIN_B = -5.0      # mode='log' bounds
MAX_B = 80.0
DENOM = abs(MIN_B - MAX_B)  # 85.0


def dice_kernel(x_ref, qwb_ref, o_ref):
    # x_ref:   (1, TILE_N)      batch along lanes
    # qwb_ref: (EMB, D + 1)     folded projection [W @ Q | b]
    # o_ref:   (EMB, TILE_N)    transposed output block (lane-dense)
    x = x_ref[...]

    # elementwise: clamp(log(1e-7 + |x|)) -> theta   (lane-dense (1, TILE_N) vregs)
    v = jnp.clip(jnp.log(1e-7 + jnp.abs(x)), MIN_B, MAX_B)
    theta = v * (math.pi / DENOM)

    s = jnp.sin(theta)   # (1, TILE_N)
    c = jnp.cos(theta)   # (1, TILE_N)

    # hyperspherical ("dice") polar coordinates, rows stacked along sublanes.
    rows = []
    s_pow = jnp.ones_like(s)          # sin^(dim-1), starts at sin^0
    for dim in range(1, D + 1):
        if dim < D:
            rows.append(s_pow * c)    # sin^(dim-1) * cos
        else:
            rows.append(s_pow * s)    # last coord: sin^D  (s_pow == sin^(D-1))
        s_pow = s_pow * s
    rows.append(jnp.ones_like(s))     # bias row (folds '+ b' into the matmul)
    polar_aug = jnp.concatenate(rows, axis=0)   # (D + 1, TILE_N)

    # out^T = [W@Q | b] @ [polar ; ones]   -> single MXU matmul
    out_t = jnp.dot(qwb_ref[...], polar_aug, preferred_element_type=jnp.float32)
    o_ref[...] = out_t.astype(o_ref.dtype)


def dice_embedding_forward(x, Q, W, b, *, tile_n=1024, out_dtype=jnp.float32):
    """x: (N,) f32; Q: (D, D); W: (EMB, D); b: (EMB,). Returns (N, EMB)."""
    assert tile_n % 128 == 0, "tile_n must be a multiple of 128 (lane width)"
    N = x.shape[0]
    emb = W.shape[0]

    # Fold the two projections + bias in the wrapper (done once, outside kernel):
    #   out^T = (W @ Q) @ polar + b[:, None]  ==  [W@Q | b] @ [polar ; 1]
    qw = jnp.asarray(W, jnp.float32) @ jnp.asarray(Q, jnp.float32)        # (EMB, D)
    qwb = jnp.concatenate(
        [qw, jnp.asarray(b, jnp.float32).reshape(emb, 1)], axis=1)        # (EMB, D+1)

    # Pad batch to a multiple of tile_n (padded rows are discarded at the end).
    n_pad = (-N) % tile_n
    xp = jnp.pad(x.astype(jnp.float32), (0, n_pad))
    Np = N + n_pad
    x2 = xp.reshape(1, Np)                                                # batch on lanes

    grid = (Np // tile_n,)
    out_t = pl.pallas_call(
        dice_kernel,
        out_shape=jax.ShapeDtypeStruct((emb, Np), out_dtype),
        grid_spec=pltpu.PrefetchScalarGridSpec(
            num_scalar_prefetch=0,
            grid=grid,
            in_specs=[
                pl.BlockSpec((1, tile_n), lambda i: (0, i)),       # x block
                pl.BlockSpec((emb, D + 1), lambda i: (0, 0)),      # resident weights
            ],
            out_specs=pl.BlockSpec((emb, tile_n), lambda i: (0, i)),
        ),
        compiler_params=pltpu.CompilerParams(
            dimension_semantics=("parallel",)),
    )(x2, qwb)

    return out_t.T[:N]                                                    # (N, EMB)


def ref_forward(x, Q, W, b):
    """Pure-JAX reference mirroring the PyTorch forward."""
    v = jnp.clip(jnp.log(1e-7 + jnp.abs(x)), MIN_B, MAX_B)
    theta = v * (math.pi / DENOM)
    polar = jnp.stack(
        [jnp.sin(theta) ** (dim - 1) * jnp.cos(theta) if dim < D
         else jnp.sin(theta) ** D
         for dim in range(1, D + 1)])                     # (D, N)
    dice = (Q @ polar).T                                  # (N, D)
    return dice @ W.T + b                                 # (N, EMB)


if __name__ == "__main__":
    key = jax.random.PRNGKey(0)
    k_m, k_w, k_b, k_x = jax.random.split(key, 4)

    # Parameters (deterministic, matching the module's __init__ shapes).
    M = jax.random.normal(k_m, (D, D), dtype=jnp.float32)
    Q, _ = jnp.linalg.qr(M, mode="complete")              # fixed orthonormal Q
    bound = 1.0 / math.sqrt(D)
    W = jax.random.uniform(k_w, (EMB, D), minval=-bound, maxval=bound,
                           dtype=jnp.float32)             # nn.Linear weight
    b = jax.random.uniform(k_b, (EMB,), minval=-bound, maxval=bound,
                           dtype=jnp.float32)             # nn.Linear bias

    # Input: a batch of scalar numbers (2 grid steps at tile_n=1024).
    N = 2048
    x = jax.random.normal(k_x, (N,), dtype=jnp.float32) * 50.0

    out = dice_embedding_forward(x, Q, W, b, tile_n=1024)
    out = jax.block_until_ready(out)

    ref = ref_forward(x, Q, W, b)
    assert out.shape == (N, EMB)
    assert jnp.allclose(out, ref, rtol=1e-4, atol=1e-4), (
        float(jnp.max(jnp.abs(out - ref))))

    print("KERNEL_OK")
</pallas_src>

<mosaic_0001>
module attributes {stable_mosaic.version = 11 : i64} {
  func.func @dice_kernel(%arg0: i32, %arg1: memref<1x1024xf32, #tpu.memory_space<vmem>>, %arg2: memref<32x11xf32, #tpu.memory_space<vmem>>, %arg3: memref<32x1024xf32, #tpu.memory_space<vmem>>) attributes {dimension_semantics = [#tpu.dimension_semantics<parallel>], iteration_bounds = array<i64: 2>, scalar_prefetch = 0 : i64, scratch_operands = 0 : i64, tpu.core_type = #tpu.core_type<tc>, window_params = [{transform_indices = @transform_0, window_bounds = array<i64: 1, 1024>}, {pipeline_mode = #tpu.pipeline_mode<synchronous>, transform_indices = @transform_1, window_bounds = array<i64: 32, 11>}, {transform_indices = @transform_2, window_bounds = array<i64: 32, 1024>}]} {
    %c0 = arith.constant 0 : index
    %c0_0 = arith.constant 0 : index
    %0 = vector.load %arg1[%c0, %c0_0] : memref<1x1024xf32, #tpu.memory_space<vmem>>, vector<1x1024xf32>
    %1 = math.absf %0 : vector<1x1024xf32>
    %cst = arith.constant 1.000000e-07 : f32
    %2 = vector.broadcast %cst : f32 to vector<1x1024xf32>
    %3 = arith.addf %2, %1 : vector<1x1024xf32>
    %4 = math.log %3 : vector<1x1024xf32>
    %cst_1 = arith.constant -5.000000e+00 : f32
    %cst_2 = arith.constant 8.000000e+01 : f32
    %5 = vector.broadcast %cst_1 : f32 to vector<1x1024xf32>
    %6 = arith.maximumf %5, %4 : vector<1x1024xf32>
    %7 = vector.broadcast %cst_2 : f32 to vector<1x1024xf32>
    %8 = arith.minimumf %7, %6 : vector<1x1024xf32>
    %cst_3 = arith.constant 0.0369599126 : f32
    %9 = vector.broadcast %cst_3 : f32 to vector<1x1024xf32>
    %10 = arith.mulf %8, %9 : vector<1x1024xf32>
    %11 = math.sin %10 : vector<1x1024xf32>
    %12 = math.cos %10 : vector<1x1024xf32>
    %cst_4 = arith.constant 1.000000e+00 : f32
    %13 = vector.broadcast %cst_4 : f32 to vector<1x1024xf32>
    %14 = arith.mulf %13, %12 : vector<1x1024xf32>
    %15 = arith.mulf %13, %11 : vector<1x1024xf32>
    %16 = arith.mulf %15, %12 : vector<1x1024xf32>
    %17 = arith.mulf %15, %11 : vector<1x1024xf32>
    %18 = arith.mulf %17, %12 : vector<1x1024xf32>
    %19 = arith.mulf %17, %11 : vector<1x1024xf32>
    %20 = arith.mulf %19, %12 : vector<1x1024xf32>
    %21 = arith.mulf %19, %11 : vector<1x1024xf32>
    %22 = arith.mulf %21, %12 : vector<1x1024xf32>
    %23 = arith.mulf %21, %11 : vector<1x1024xf32>
    %24 = arith.mulf %23, %12 : vector<1x1024xf32>
    %25 = arith.mulf %23, %11 : vector<1x1024xf32>
    %26 = arith.mulf %25, %12 : vector<1x1024xf32>
    %27 = arith.mulf %25, %11 : vector<1x1024xf32>
    %28 = arith.mulf %27, %12 : vector<1x1024xf32>
    %29 = arith.mulf %27, %11 : vector<1x1024xf32>
    %30 = arith.mulf %29, %12 : vector<1x1024xf32>
    %31 = arith.mulf %29, %11 : vector<1x1024xf32>
    %32 = arith.mulf %31, %11 : vector<1x1024xf32>
    %cst_5 = arith.constant 1.000000e+00 : f32
    %33 = vector.broadcast %cst_5 : f32 to vector<1x1024xf32>
    %34 = tpu.concatenate %14, %16, %18, %20, %22, %24, %26, %28, %30, %32, %33 in 0 : vector<1x1024xf32>, vector<1x1024xf32>, vector<1x1024xf32>, vector<1x1024xf32>, vector<1x1024xf32>, vector<1x1024xf32>, vector<1x1024xf32>, vector<1x1024xf32>, vector<1x1024xf32>, vector<1x1024xf32>, vector<1x1024xf32> -> vector<11x1024xf32>
    %c0_6 = arith.constant 0 : index
    %c0_7 = arith.constant 0 : index
    %35 = vector.load %arg2[%c0_6, %c0_7] : memref<32x11xf32, #tpu.memory_space<vmem>>, vector<32x11xf32>
    %cst_8 = arith.constant dense<0.000000e+00> : vector<32x1024xf32>
    %36 = tpu.matmul %35, %34, %cst_8 {dimension_numbers = #tpu.dot_dimension_numbers<[1], [0], [0], [1], [0, 0, 1, 1], [], []>} : vector<32x11xf32>, vector<11x1024xf32>, vector<32x1024xf32> -> vector<32x1024xf32>
    %c0_9 = arith.constant 0 : index
    %c0_10 = arith.constant 0 : index
    %37 = vector.load %arg3[%c0_9, %c0_10] : memref<32x1024xf32, #tpu.memory_space<vmem>>, vector<32x1024xf32>
    tpu.vector_store %arg3[%c0_9, %c0_10], %36 {strides = array<i32>} : memref<32x1024xf32, #tpu.memory_space<vmem>>, vector<32x1024xf32>,
    return
  }
  func.func @transform_0(%arg0: i32) -> (i32, i32) {
    %c0_i32 = arith.constant 0 : i32
    %c0_i32_0 = arith.constant 0 : i32
    return %c0_i32, %arg0 : i32, i32
  }
  func.func @transform_1(%arg0: i32) -> (i32, i32) {
    %c0_i32 = arith.constant 0 : i32
    %c0_i32_0 = arith.constant 0 : i32
    %c0_i32_1 = arith.constant 0 : i32
    return %c0_i32, %c0_i32_0 : i32, i32
  }
  func.func @transform_2(%arg0: i32) -> (i32, i32) {
    %c0_i32 = arith.constant 0 : i32
    %c0_i32_0 = arith.constant 0 : i32
    return %c0_i32, %arg0 : i32, i32
  }
}

</mosaic_0001>

<llo_original>
// kernel: tpu_custom_call.1
$region0: #{tpu_custom_call.1}
  #allocation0 [shape = 'u32[]', space=smem, size = 0x4, offset = 0x4, fixed_abs, tag = 'smem constant byte address 0x4 - core index']
  #allocation1 [shape = 'u32[144,128]{1,0:T(1,128)}', space=vmem, size = 0x12000, scoped, tag = 'internal scratch']
  %s0 = inlined_call_operand.vmem [shape: f32[1,2048], index: 0, kind: input, shape index: {}]
  %s1 = inlined_call_operand.vmem [shape: f32[32,11], index: 1, kind: input, shape index: {}]
  %s2 = inlined_call_operand.hbm [shape: f32[32,2048], index: 2, kind: output, shape index: {}]
  %s3 = sld [smem:[#allocation0]]
  $region41: #{tpu_custom_call.1} parent=0
    _
  %s5 = ssub.s32 1, %s3
  %s6 = scalar_select 0, %s5, %s3
  $region1: #{tpu_custom_call.1} parent=0
    #allocation2 [shape = 'u8[262144]{0}', space=vmem, size = 0x40000, scoped, tag = 'output window, operand 0']
    #allocation3 [shape = 's32[2]{0}', space=sflag, size = 0x8, scoped, tag = 'scoped memory for tpu_custom_call.1']
    %7 = vsyncpa [#allocation3], 0
    %s8 = scalar_lea.sflag [#allocation3], 1
    %9 = vsyncpa %s8, 0
    loop: start=0, step=1, limit=4
    $region2: #{tpu_custom_call.1} parent=1 // loop_pre_header
      _
    $region3: #{tpu_custom_call.1} parent=1 // loop_header
      %s11 = sphi 0, %s15
      %p12 = scmp.ge.s32.totalorder %s11, 4
      %s21 = sphi 0, %s23
      %s24 = sphi 0, %s21
      %s25 = sphi 0, %s24
      %s41 = sphi 0, %s25
      %s45 = sphi 0, %s45
      %s47 = sphi 0, %s45
      %s48 = sphi 0, %s47
      %s62 = sphi 0, %s48
      %s68 = sphi 0, %s70
      %s71 = sphi 0, %s68
      %s72 = sphi 0, %s71
      %s88 = sphi 0, %s72
    $region4: #{tpu_custom_call.1} parent=1 // loop_header_branch
      %14 = sbr.rel (%p12) target = $region8
    $region5: #{tpu_custom_call.1} parent=1 // loop_body
      %s16 = ssub.s32 %s11, 1
      %s17 = ssub.s32 %s11, 2
      %s18 = sadd.s32 %s11, 1
      %s19 = ssub.s32 %s11, %s18
      %p20 = scmp.eq.s32.totalorder %s19, 0
      %s22 = sadd.s32 %s21, 1
      %s23 = scalar_select %p20, %s21, %s22
      %p26 = pneg %p20
      %p27 = scmp.eq.s32.totalorder %s11, 1
      %p28 = por %p26, %p27
      %p29 = scmp.ne.s32.totalorder %s21, %s24
      %p30 = scmp.eq.s32.totalorder %s11, 0
      %p31 = por %p29, %p30
      %p32 = scmp.ne.s32.totalorder %s21, %s24
      %p33 = scmp.eq.s32.totalorder %s16, 1
      %p34 = por %p32, %p33
      %p35 = scmp.ne.s32.totalorder %s24, %s25
      %p36 = scmp.eq.s32.totalorder %s16, 0
      %p37 = por %p35, %p36
      %p38 = scmp.ne.s32.totalorder %s24, %s25
      %p39 = scmp.eq.s32.totalorder %s17, 1
      %p40 = por %p38, %p39
      %p42 = scmp.ne.s32.totalorder %s25, %s41
      %p43 = scmp.eq.s32.totalorder %s17, 0
      %p44 = por %p42, %p43
      %s46 = sadd.s32 %s45, 1
      %p49 = scmp.eq.s32.totalorder %s11, 1
      %p50 = scmp.ne.s32.totalorder %s45, %s47
      %p51 = scmp.eq.s32.totalorder %s11, 0
      %p52 = por %p50, %p51
      %p53 = scmp.ne.s32.totalorder %s45, %s47
      %p54 = scmp.eq.s32.totalorder %s16, 1
      %p55 = por %p53, %p54
      %p56 = scmp.ne.s32.totalorder %s47, %s48
      %p57 = scmp.eq.s32.totalorder %s16, 0
      %p58 = por %p56, %p57
      %p59 = scmp.ne.s32.totalorder %s47, %s48
      %p60 = scmp.eq.s32.totalorder %s17, 1
      %p61 = por %p59, %p60
      %p63 = scmp.ne.s32.totalorder %s48, %s62
      %p64 = scmp.eq.s32.totalorder %s17, 0
      %p65 = por %p63, %p64
      %s66 = ssub.s32 %s11, %s18
      %p67 = scmp.eq.s32.totalorder %s66, 0
      %s69 = sadd.s32 %s68, 1
      %s70 = scalar_select %p67, %s68, %s69
      %p73 = pneg %p67
      %p74 = scmp.eq.s32.totalorder %s11, 1
      %p75 = por %p73, %p74
      %p76 = scmp.ne.s32.totalorder %s68, %s71
      %p77 = scmp.eq.s32.totalorder %s11, 0
      %p78 = por %p76, %p77
      %p79 = scmp.ne.s32.totalorder %s68, %s71
      %p80 = scmp.eq.s32.totalorder %s16, 1
      %p81 = por %p79, %p80
      %p82 = scmp.ne.s32.totalorder %s71, %s72
      %p83 = scmp.eq.s32.totalorder %s16, 0
      %p84 = por %p82, %p83
      %p85 = scmp.ne.s32.totalorder %s71, %s72
      %p86 = scmp.eq.s32.totalorder %s17, 1
      %p87 = por %p85, %p86
      %p89 = scmp.ne.s32.totalorder %s72, %s88
      %p90 = scmp.eq.s32.totalorder %s17, 0
      %p91 = por %p89, %p90
      %p92 = scmp.le.s32.totalorder 1, %s11
      %p93 = scmp.lt.s32.totalorder %s11, 3
      %p94 = pnand %p92, %p93
      %p95 = pneg %p94
      // Predicated region
      $region9: #{tpu_custom_call.1} parent=5 // pred_check
        _
      $region10: #{tpu_custom_call.1} parent=5 // pred_check_branch
        %97 = sbr.rel (%p94) target = $region12
      $region11: #{tpu_custom_call.1} parent=5 // pred_region
        %s98 = ssub.s32 %s11, 1
        // Predicated region
        $region13: #{tpu_custom_call.1} parent=11 // pred_check
          %p99 = pneg %p58
        $region14: #{tpu_custom_call.1} parent=11 // pred_check_branch
          %101 = sbr.rel (%p99) target = $region16
        $region15: #{tpu_custom_call.1} parent=11 // pred_region
          _
        $region16: #{tpu_custom_call.1} parent=11 // pred_fallthru
          _
      $region12: #{tpu_custom_call.1} parent=5 // pred_fallthru
        _
      %p102 = scmp.lt.s32.totalorder %s11, 2
      // Predicated region
      $region17: #{tpu_custom_call.1} parent=5 // pred_check
        %p103 = pneg %p102
      $region18: #{tpu_custom_call.1} parent=5 // pred_check_branch
        %105 = sbr.rel (%p103) target = $region20
      $region19: #{tpu_custom_call.1} parent=5 // pred_region
        // Predicated region
        $region21: #{tpu_custom_call.1} parent=19 // pred_check
          %p106 = pneg %p31
        $region22: #{tpu_custom_call.1} parent=19 // pred_check_branch
          %108 = sbr.rel (%p106) target = $region24
        $region23: #{tpu_custom_call.1} parent=19 // pred_region
          %s109 = smul.u32 8, %s11
          %p110 = scmp.lt.s32.totalorder %s109, 15
          %s111 = scalar_select %p110, %s109, 15
          %s112 = scalar_lea.vmem %s0, %s111
          %s113 = smul.u32 8, %s11
        $region24: #{tpu_custom_call.1} parent=19 // pred_fallthru
          _
      $region20: #{tpu_custom_call.1} parent=5 // pred_fallthru
        _
      %p114 = scmp.le.s32.totalorder 1, %s11
      %p115 = scmp.lt.s32.totalorder %s11, 3
      %p116 = pnand %p114, %p115
      %p117 = pneg %p116
      // Predicated region
      $region25: #{tpu_custom_call.1} parent=5 // pred_check
        _
      $region26: #{tpu_custom_call.1} parent=5 // pred_check_branch
        %119 = sbr.rel (%p116) target = $region28
      $region27: #{tpu_custom_call.1} parent=5 // pred_region
        %s120 = ssub.s32 %s11, 1
        %s121 = smul.u32 8, %s16
        %p122 = scmp.lt.s32.totalorder %s121, 15
        %s123 = scalar_select %p122, %s121, 15
        %s124 = scalar_lea.vmem %s0, %s123
        %p125 = pneg %p37
        %p126 = pneg %p34
        %p127 = pneg %p58
        %p128 = pneg %p55
        %p129 = pneg %p84
        %p130 = pneg %p81
        %s131 = sand.u32 %s71, 1
        %s132 = scalar_lea.sflag [#allocation3], %s131
        %s133 = sand.u32 %s71, 1
        %s134 = smul.addr %s133, 256
        %s135 = scalar_lea.vmem [#allocation2], %s134
        %s136 = smul.u32 8, %s16
        %p137 = scmp.lt.s32.totalorder %s136, 15
        %s138 = scalar_select %p137, %s136, 15
        %s139 = scalar_lea.vmem %s0, %s138
        %s140 = smul.u32 8, %s16
        %s141 = smul.u32 8, %s16
        %v142 = vld [vmem:[%s139] sm:$0xff]
        %v143 = vand.u32 2147483647, %v142
        %v144 = vadd.f32 %v143, 1e-07
        %v145 = vlog2.pop %v144
        %v146 = vmul.f32 %v145, 0.6931472
        %v147 = vmax.f32 %v146, -5.0
        %v148 = vmin.f32 %v147, 80.0
        %v149 = vmul.f32 %v148, 0.036959913
        %v150 = vand.u32 2147483647, %v149
        %vm151 = vcmp.le.f32.partialorder %v150, 0.7853982
        %vm152 = vcmp.lt.s32.totalorder %v149, 0
        %v153 = vand.u32 %v149, 2139095040
        %v154 = vshrl.u32 %v153, 23
        %v155 = vsub.s32 %v154, 127
        %v156 = vand.u32 2147483647, %v149
        %v157 = vand.u32 %v156, 8388607
        %v158 = vor.u32 %v157, 8388608
        %v159 = vsub.s32 0, %v158
        %v160 = vadd.s32 %v155, 1
        %vm161 = vcmp.gt.s32.totalorder %v160, 0
        %v162 = vsel %vm161, %v160, 0
        %v163 = vshrl.u32 %v162, 5
        %v164 = vand.u32 %v162, 31
        %v165 = vsub.s32 32, %v164
        %v166 = vshrl.u32 683565275, %v165
        %v167 = vshll.u32 683565275, %v164
        %v168 = vshrl.u32 2475754826, %v165
        %v169 = vor.u32 %v167, %v168
        %v170 = vshll.u32 2475754826, %v164
        %v171 = vshrl.u32 2131351028, %v165
        %v172 = vor.u32 %v170, %v171
        %v173 = vshll.u32 2131351028, %v164
        %v174 = vshrl.u32 2102212464, %v165
        %v175 = vor.u32 %v173, %v174
        %v176 = vshll.u32 2102212464, %v164
        %v177 = vshrl.u32 920167782, %v165
        %v178 = vor.u32 %v176, %v177
        %v179 = vshll.u32 920167782, %v164
        %v180 = vshrl.u32 1326507024, %v165
        %v181 = vor.u32 %v179, %v180
        %vm182 = vcmp.lt.s32.totalorder %v163, 1
        %vm183 = vcmp.lt.s32.totalorder %v163, 2
        %vm184 = vcmp.lt.s32.totalorder %v163, 3
        %vm185 = vcmp.lt.s32.totalorder %v163, 4
        %v186 = vsel %vm182, %v166, %v169
        %v187 = vsel %vm185, %v175, 2102212464
        %v188 = vsel %vm184, %v172, %v187
        %v189 = vsel %vm183, %v186, %v188
        %v190 = vsel %vm182, %v169, %v172
        %v191 = vsel %vm185, %v178, 920167782
        %v192 = vsel %vm184, %v175, %v191
        %v193 = vsel %vm183, %v190, %v192
        %v194 = vsel %vm182, %v172, %v175
        %v195 = vsel %vm185, %v181, 1326507024
        %v196 = vsel %vm184, %v178, %v195
        %v197 = vsel %vm183, %v194, %v196
        %v198 = vshll.u32 %v158, 8
        %v199 = vmul.u32.u64.compose %v198, %v197
        %v200 = vextract.low.u32 %v199
        %v201 = vextract.high.u32 %v199
        %v202 = vmul.u32.u64.compose %v198, %v193
        %v203 = vextract.low.u32 %v202
        %v204 = vextract.high.u32 %v202
        %v205 = vmul.u32 %v198, %v189
        %v206 = vadd.s32 %v201, %v203
        %vm207 = vc.u32 %v201, %v203
        %v208 = vadd.s32 %v204, 1
        %v209 = vsel %vm207, %v208, %v204
        %v210 = vadd.s32 %v205, %v209
        %v211 = vadd.s32 %v210, 536870912
        %v212 = vshrl.u32 %v211, 30
        %v213 = vshll.u32 %v212, 30
        %v214 = vsub.s32 %v210, %v213
        %vm215 = vcmp.lt.s32.totalorder %v214, 0
        %v216 = vsub.s32 0, %v214
        %v217 = vsel %vm215, %v216, %v214
        %v218 = vclz %v217
        %v219 = vsub.s32 %v218, 2
        %vm220 = vcmp.gt.s32.totalorder 0, %v219
        %v221 = vsel %vm220, 0, %v219
        %v222 = vsub.s32 32, %v221
        %v223 = vshll.u32 %v214, %v221
        %v224 = vshrl.u32 %v206, %v222
        %v225 = vor.u32 %v223, %v224
        %v226 = vsub.s32 4294967266, %v221
        %v227 = vadd.s32 %v226, 127
        %v228 = vshll.u32 %v227, 23
        %v229 = vor.u32 4788187, %v228
        %v230 = vand.u32 2147483647, %v229
        %v232 = vcvt.s32.f32 %v225
        %v233 = vmul.f32 %v232, %v230
        %v234 = vxor.u32 %v233, 2147483648
        %v235 = vsel %vm152, %v234, %v233
        %v236 = vsub.s32 4, %v212
        %v237 = vsel %vm152, %v236, %v212
        %v238 = vsel %vm151, %v149, %v235
        %v239 = vsel %vm151, 0, %v237
        %v240 = vcosq.f32.pop %v238
        %v241 = vsinq.f32.pop %v238
        %vm242 = vweird.f32 %v149
        %v243 = vadd.s32 %v239, 3
        %v244 = vand.u32 %v243, 3
        %vm245 = vcmp.lt.s32.totalorder %v244, 2
        %vm246 = vcmp.eq.s32.totalorder %v244, 0
        %v247 = vxor.u32 %v241, 2147483648
        %v248 = vsel %vm246, %v240, %v247
        %vm249 = vcmp.eq.s32.totalorder %v244, 2
        %v250 = vxor.u32 %v240, 2147483648
        %v251 = vsel %vm249, %v250, %v241
        %v252 = vsel %vm245, %v248, %v251
        %v253 = vsel %vm242, nan, %v252
        %v254 = vand.u32 2147483647, %v149
        %vm255 = vcmp.le.f32.partialorder %v254, 0.7853982
        %vm256 = vcmp.lt.s32.totalorder %v149, 0
        %v257 = vand.u32 %v149, 2139095040
        %v258 = vshrl.u32 %v257, 23
        %v259 = vsub.s32 %v258, 127
        %v260 = vand.u32 2147483647, %v149
        %v261 = vand.u32 %v260, 8388607
        %v262 = vor.u32 %v261, 8388608
        %v263 = vsub.s32 0, %v262
        %v264 = vadd.s32 %v259, 1
        %vm265 = vcmp.gt.s32.totalorder %v264, 0
        %v266 = vsel %vm265, %v264, 0
        %v267 = vshrl.u32 %v266, 5
        %v268 = vand.u32 %v266, 31
        %v269 = vsub.s32 32, %v268
        %v270 = vshrl.u32 683565275, %v269
        %v271 = vshll.u32 683565275, %v268
        %v272 = vshrl.u32 2475754826, %v269
        %v273 = vor.u32 %v271, %v272
        %v274 = vshll.u32 2475754826, %v268
        %v275 = vshrl.u32 2131351028, %v269
        %v276 = vor.u32 %v274, %v275
        %v277 = vshll.u32 2131351028, %v268
        %v278 = vshrl.u32 2102212464, %v269
        %v279 = vor.u32 %v277, %v278
        %v280 = vshll.u32 2102212464, %v268
        %v281 = vshrl.u32 920167782, %v269
        %v282 = vor.u32 %v280, %v281
        %v283 = vshll.u32 920167782, %v268
        %v284 = vshrl.u32 1326507024, %v269
        %v285 = vor.u32 %v283, %v284
        %vm286 = vcmp.lt.s32.totalorder %v267, 1
        %vm287 = vcmp.lt.s32.totalorder %v267, 2
        %vm288 = vcmp.lt.s32.totalorder %v267, 3
        %vm289 = vcmp.lt.s32.totalorder %v267, 4
        %v290 = vsel %vm286, %v270, %v273
        %v291 = vsel %vm289, %v279, 2102212464
        %v292 = vsel %vm288, %v276, %v291
        %v293 = vsel %vm287, %v290, %v292
        %v294 = vsel %vm286, %v273, %v276
        %v295 = vsel %vm289, %v282, 920167782
        %v296 = vsel %vm288, %v279, %v295
        %v297 = vsel %vm287, %v294, %v296
        %v298 = vsel %vm286, %v276, %v279
        %v299 = vsel %vm289, %v285, 1326507024
        %v300 = vsel %vm288, %v282, %v299
        %v301 = vsel %vm287, %v298, %v300
        %v302 = vshll.u32 %v262, 8
        %v303 = vmul.u32.u64.compose %v302, %v301
        %v304 = vextract.low.u32 %v303
        %v305 = vextract.high.u32 %v303
        %v306 = vmul.u32.u64.compose %v302, %v297
        %v307 = vextract.low.u32 %v306
        %v308 = vextract.high.u32 %v306
        %v309 = vmul.u32 %v302, %v293
        %v310 = vadd.s32 %v305, %v307
        %vm311 = vc.u32 %v305, %v307
        %v312 = vadd.s32 %v308, 1
        %v313 = vsel %vm311, %v312, %v308
        %v314 = vadd.s32 %v309, %v313
        %v315 = vadd.s32 %v314, 536870912
        %v316 = vshrl.u32 %v315, 30
        %v317 = vshll.u32 %v316, 30
        %v318 = vsub.s32 %v314, %v317
        %vm319 = vcmp.lt.s32.totalorder %v318, 0
        %v320 = vsub.s32 0, %v318
        %v321 = vsel %vm319, %v320, %v318
        %v322 = vclz %v321
        %v323 = vsub.s32 %v322, 2
        %vm324 = vcmp.gt.s32.totalorder 0, %v323
        %v325 = vsel %vm324, 0, %v323
        %v326 = vsub.s32 32, %v325
        %v327 = vshll.u32 %v318, %v325
        %v328 = vshrl.u32 %v310, %v326
        %v329 = vor.u32 %v327, %v328
        %v330 = vsub.s32 4294967266, %v325
        %v331 = vadd.s32 %v330, 127
        %v332 = vshll.u32 %v331, 23
        %v333 = vor.u32 4788187, %v332
        %v334 = vand.u32 2147483647, %v333
        %v336 = vcvt.s32.f32 %v329
        %v337 = vmul.f32 %v336, %v334
        %v338 = vxor.u32 %v337, 2147483648
        %v339 = vsel %vm256, %v338, %v337
        %v340 = vsub.s32 4, %v316
        %v341 = vsel %vm256, %v340, %v316
        %v342 = vsel %vm255, %v149, %v339
        %v343 = vsel %vm255, 0, %v341
        %v344 = vcosq.f32.pop %v342
        %v345 = vsinq.f32.pop %v342
        %vm346 = vweird.f32 %v149
        %v347 = vand.u32 %v343, 3
        %vm348 = vcmp.lt.s32.totalorder %v347, 2
        %vm349 = vcmp.eq.s32.totalorder %v347, 0
        %v350 = vxor.u32 %v345, 2147483648
        %v351 = vsel %vm349, %v344, %v350
        %vm352 = vcmp.eq.s32.totalorder %v347, 2
        %v353 = vxor.u32 %v344, 2147483648
        %v354 = vsel %vm352, %v353, %v345
        %v355 = vsel %vm348, %v351, %v354
        %v356 = vsel %vm346, nan, %v355
        %v357 = vmul.f32 %v253, %v356
        %v358 = vmul.f32 %v253, %v253
        %v359 = vmul.f32 %v358, %v356
        %v360 = vmul.f32 %v358, %v253
        %v361 = vmul.f32 %v360, %v356
        %v362 = vmul.f32 %v360, %v253
        %v363 = vmul.f32 %v362, %v356
        %v364 = vmul.f32 %v362, %v253
        %v365 = vmul.f32 %v364, %v356
        %v366 = vmul.f32 %v364, %v253
        %v367 = vmul.f32 %v366, %v356
        %v368 = vmul.f32 %v366, %v253
        %v369 = vmul.f32 %v368, %v356
        %v370 = vmul.f32 %v368, %v253
        %v371 = vmul.f32 %v370, %v356
        %v372 = vmul.f32 %v370, %v253
        %v373 = vmul.f32 %v372, %v253
        %v375 = vlaneseq
        %v376 = vshrl.u32 %v375, 7
        %v377 = vsub.s32 0, %v376
        %v378 = vrot.slane %v356, %v377
        %v379 = vlaneseq
        %v380 = vshrl.u32 %v379, 7
        %v381 = vsub.s32 1, %v380
        %v382 = vrot.slane %v356, %v381
        %v383 = vlaneseq
        %v384 = vshrl.u32 %v383, 7
        %v385 = vsub.s32 2, %v384
        %v386 = vrot.slane %v356, %v385
        %v387 = vlaneseq
        %v388 = vshrl.u32 %v387, 7
        %v389 = vsub.s32 3, %v388
        %v390 = vrot.slane %v356, %v389
        %v391 = vlaneseq
        %v392 = vshrl.u32 %v391, 7
        %v393 = vsub.s32 4, %v392
        %v394 = vrot.slane %v356, %v393
        %v395 = vlaneseq
        %v396 = vshrl.u32 %v395, 7
        %v397 = vsub.s32 5, %v396
        %v398 = vrot.slane %v356, %v397
        %v399 = vlaneseq
        %v400 = vshrl.u32 %v399, 7
        %v401 = vsub.s32 6, %v400
        %v402 = vrot.slane %v356, %v401
        %v403 = vlaneseq
        %v404 = vshrl.u32 %v403, 7
        %v405 = vsub.s32 7, %v404
        %v406 = vrot.slane %v356, %v405
        %v416 = vlaneseq
        %v417 = vshrl.u32 %v416, 7
        %v418 = vsub.s32 0, %v417
        %v419 = vrot.slane %v357, %v418
        %v420 = vlaneseq
        %v421 = vshrl.u32 %v420, 7
        %v422 = vsub.s32 1, %v421
        %v423 = vrot.slane %v357, %v422
        %v424 = vlaneseq
        %v425 = vshrl.u32 %v424, 7
        %v426 = vsub.s32 2, %v425
        %v427 = vrot.slane %v357, %v426
        %v428 = vlaneseq
        %v429 = vshrl.u32 %v428, 7
        %v430 = vsub.s32 3, %v429
        %v431 = vrot.slane %v357, %v430
        %v432 = vlaneseq
        %v433 = vshrl.u32 %v432, 7
        %v434 = vsub.s32 4, %v433
        %v435 = vrot.slane %v357, %v434
        %v436 = vlaneseq
        %v437 = vshrl.u32 %v436, 7
        %v438 = vsub.s32 5, %v437
        %v439 = vrot.slane %v357, %v438
        %v440 = vlaneseq
        %v441 = vshrl.u32 %v440, 7
        %v442 = vsub.s32 6, %v441
        %v443 = vrot.slane %v357, %v442
        %v444 = vlaneseq
        %v445 = vshrl.u32 %v444, 7
        %v446 = vsub.s32 7, %v445
        %v447 = vrot.slane %v357, %v446
        %v457 = vlaneseq
        %v458 = vshrl.u32 %v457, 7
        %v459 = vsub.s32 0, %v458
        %v460 = vrot.slane %v359, %v459
        %v461 = vlaneseq
        %v462 = vshrl.u32 %v461, 7
        %v463 = vsub.s32 1, %v462
        %v464 = vrot.slane %v359, %v463
        %v465 = vlaneseq
        %v466 = vshrl.u32 %v465, 7
        %v467 = vsub.s32 2, %v466
        %v468 = vrot.slane %v359, %v467
        %v469 = vlaneseq
        %v470 = vshrl.u32 %v469, 7
        %v471 = vsub.s32 3, %v470
        %v472 = vrot.slane %v359, %v471
        %v473 = vlaneseq
        %v474 = vshrl.u32 %v473, 7
        %v475 = vsub.s32 4, %v474
        %v476 = vrot.slane %v359, %v475
        %v477 = vlaneseq
        %v478 = vshrl.u32 %v477, 7
        %v479 = vsub.s32 5, %v478
        %v480 = vrot.slane %v359, %v479
        %v481 = vlaneseq
        %v482 = vshrl.u32 %v481, 7
        %v483 = vsub.s32 6, %v482
        %v484 = vrot.slane %v359, %v483
        %v485 = vlaneseq
        %v486 = vshrl.u32 %v485, 7
        %v487 = vsub.s32 7, %v486
        %v488 = vrot.slane %v359, %v487
        %v498 = vlaneseq
        %v499 = vshrl.u32 %v498, 7
        %v500 = vsub.s32 0, %v499
        %v501 = vrot.slane %v361, %v500
        %v502 = vlaneseq
        %v503 = vshrl.u32 %v502, 7
        %v504 = vsub.s32 1, %v503
        %v505 = vrot.slane %v361, %v504
        %v506 = vlaneseq
        %v507 = vshrl.u32 %v506, 7
        %v508 = vsub.s32 2, %v507
        %v509 = vrot.slane %v361, %v508
        %v510 = vlaneseq
        %v511 = vshrl.u32 %v510, 7
        %v512 = vsub.s32 3, %v511
        %v513 = vrot.slane %v361, %v512
        %v514 = vlaneseq
        %v515 = vshrl.u32 %v514, 7
        %v516 = vsub.s32 4, %v515
        %v517 = vrot.slane %v361, %v516
        %v518 = vlaneseq
        %v519 = vshrl.u32 %v518, 7
        %v520 = vsub.s32 5, %v519
        %v521 = vrot.slane %v361, %v520
        %v522 = vlaneseq
        %v523 = vshrl.u32 %v522, 7
        %v524 = vsub.s32 6, %v523
        %v525 = vrot.slane %v361, %v524
        %v526 = vlaneseq
        %v527 = vshrl.u32 %v526, 7
        %v528 = vsub.s32 7, %v527
        %v529 = vrot.slane %v361, %v528
        %v539 = vlaneseq
        %v540 = vshrl.u32 %v539, 7
        %v541 = vsub.s32 0, %v540
        %v542 = vrot.slane %v363, %v541
        %v543 = vlaneseq
        %v544 = vshrl.u32 %v543, 7
        %v545 = vsub.s32 1, %v544
        %v546 = vrot.slane %v363, %v545
        %v547 = vlaneseq
        %v548 = vshrl.u32 %v547, 7
        %v549 = vsub.s32 2, %v548
        %v550 = vrot.slane %v363, %v549
        %v551 = vlaneseq
        %v552 = vshrl.u32 %v551, 7
        %v553 = vsub.s32 3, %v552
        %v554 = vrot.slane %v363, %v553
        %v555 = vlaneseq
        %v556 = vshrl.u32 %v555, 7
        %v557 = vsub.s32 4, %v556
        %v558 = vrot.slane %v363, %v557
        %v559 = vlaneseq
        %v560 = vshrl.u32 %v559, 7
        %v561 = vsub.s32 5, %v560
        %v562 = vrot.slane %v363, %v561
        %v563 = vlaneseq
        %v564 = vshrl.u32 %v563, 7
        %v565 = vsub.s32 6, %v564
        %v566 = vrot.slane %v363, %v565
        %v567 = vlaneseq
        %v568 = vshrl.u32 %v567, 7
        %v569 = vsub.s32 7, %v568
        %v570 = vrot.slane %v363, %v569
        %v580 = vlaneseq
        %v581 = vshrl.u32 %v580, 7
        %v582 = vsub.s32 0, %v581
        %v583 = vrot.slane %v365, %v582
        %v584 = vlaneseq
        %v585 = vshrl.u32 %v584, 7
        %v586 = vsub.s32 1, %v585
        %v587 = vrot.slane %v365, %v586
        %v588 = vlaneseq
        %v589 = vshrl.u32 %v588, 7
        %v590 = vsub.s32 2, %v589
        %v591 = vrot.slane %v365, %v590
        %v592 = vlaneseq
        %v593 = vshrl.u32 %v592, 7
        %v594 = vsub.s32 3, %v593
        %v595 = vrot.slane %v365, %v594
        %v596 = vlaneseq
        %v597 = vshrl.u32 %v596, 7
        %v598 = vsub.s32 4, %v597
        %v599 = vrot.slane %v365, %v598
        %v600 = vlaneseq
        %v601 = vshrl.u32 %v600, 7
        %v602 = vsub.s32 5, %v601
        %v603 = vrot.slane %v365, %v602
        %v604 = vlaneseq
        %v605 = vshrl.u32 %v604, 7
        %v606 = vsub.s32 6, %v605
        %v607 = vrot.slane %v365, %v606
        %v608 = vlaneseq
        %v609 = vshrl.u32 %v608, 7
        %v610 = vsub.s32 7, %v609
        %v611 = vrot.slane %v365, %v610
        %v621 = vlaneseq
        %v622 = vshrl.u32 %v621, 7
        %v623 = vsub.s32 0, %v622
        %v624 = vrot.slane %v367, %v623
        %v625 = vlaneseq
        %v626 = vshrl.u32 %v625, 7
        %v627 = vsub.s32 1, %v626
        %v628 = vrot.slane %v367, %v627
        %v629 = vlaneseq
        %v630 = vshrl.u32 %v629, 7
        %v631 = vsub.s32 2, %v630
        %v632 = vrot.slane %v367, %v631
        %v633 = vlaneseq
        %v634 = vshrl.u32 %v633, 7
        %v635 = vsub.s32 3, %v634
        %v636 = vrot.slane %v367, %v635
        %v637 = vlaneseq
        %v638 = vshrl.u32 %v637, 7
        %v639 = vsub.s32 4, %v638
        %v640 = vrot.slane %v367, %v639
        %v641 = vlaneseq
        %v642 = vshrl.u32 %v641, 7
        %v643 = vsub.s32 5, %v642
        %v644 = vrot.slane %v367, %v643
        %v645 = vlaneseq
        %v646 = vshrl.u32 %v645, 7
        %v647 = vsub.s32 6, %v646
        %v648 = vrot.slane %v367, %v647
        %v649 = vlaneseq
        %v650 = vshrl.u32 %v649, 7
        %v651 = vsub.s32 7, %v650
        %v652 = vrot.slane %v367, %v651
        %v662 = vlaneseq
        %v663 = vshrl.u32 %v662, 7
        %v664 = vsub.s32 0, %v663
        %v665 = vrot.slane %v369, %v664
        %v666 = vlaneseq
        %v667 = vshrl.u32 %v666, 7
        %v668 = vsub.s32 1, %v667
        %v669 = vrot.slane %v369, %v668
        %v670 = vlaneseq
        %v671 = vshrl.u32 %v670, 7
        %v672 = vsub.s32 2, %v671
        %v673 = vrot.slane %v369, %v672
        %v674 = vlaneseq
        %v675 = vshrl.u32 %v674, 7
        %v676 = vsub.s32 3, %v675
        %v677 = vrot.slane %v369, %v676
        %v678 = vlaneseq
        %v679 = vshrl.u32 %v678, 7
        %v680 = vsub.s32 4, %v679
        %v681 = vrot.slane %v369, %v680
        %v682 = vlaneseq
        %v683 = vshrl.u32 %v682, 7
        %v684 = vsub.s32 5, %v683
        %v685 = vrot.slane %v369, %v684
        %v686 = vlaneseq
        %v687 = vshrl.u32 %v686, 7
        %v688 = vsub.s32 6, %v687
        %v689 = vrot.slane %v369, %v688
        %v690 = vlaneseq
        %v691 = vshrl.u32 %v690, 7
        %v692 = vsub.s32 7, %v691
        %v693 = vrot.slane %v369, %v692
        %v703 = vlaneseq
        %v704 = vshrl.u32 %v703, 7
        %v705 = vsub.s32 0, %v704
        %v706 = vrot.slane %v371, %v705
        %v707 = vlaneseq
        %v708 = vshrl.u32 %v707, 7
        %v709 = vsub.s32 1, %v708
        %v710 = vrot.slane %v371, %v709
        %v711 = vlaneseq
        %v712 = vshrl.u32 %v711, 7
        %v713 = vsub.s32 2, %v712
        %v714 = vrot.slane %v371, %v713
        %v715 = vlaneseq
        %v716 = vshrl.u32 %v715, 7
        %v717 = vsub.s32 3, %v716
        %v718 = vrot.slane %v371, %v717
        %v719 = vlaneseq
        %v720 = vshrl.u32 %v719, 7
        %v721 = vsub.s32 4, %v720
        %v722 = vrot.slane %v371, %v721
        %v723 = vlaneseq
        %v724 = vshrl.u32 %v723, 7
        %v725 = vsub.s32 5, %v724
        %v726 = vrot.slane %v371, %v725
        %v727 = vlaneseq
        %v728 = vshrl.u32 %v727, 7
        %v729 = vsub.s32 6, %v728
        %v730 = vrot.slane %v371, %v729
        %v731 = vlaneseq
        %v732 = vshrl.u32 %v731, 7
        %v733 = vsub.s32 7, %v732
        %v734 = vrot.slane %v371, %v733
        %v744 = vlaneseq
        %v745 = vshrl.u32 %v744, 7
        %v746 = vsub.s32 0, %v745
        %v747 = vrot.slane %v373, %v746
        %v748 = vlaneseq
        %v749 = vshrl.u32 %v748, 7
        %v750 = vsub.s32 1, %v749
        %v751 = vrot.slane %v373, %v750
        %v752 = vlaneseq
        %v753 = vshrl.u32 %v752, 7
        %v754 = vsub.s32 2, %v753
        %v755 = vrot.slane %v373, %v754
        %v756 = vlaneseq
        %v757 = vshrl.u32 %v756, 7
        %v758 = vsub.s32 3, %v757
        %v759 = vrot.slane %v373, %v758
        %v760 = vlaneseq
        %v761 = vshrl.u32 %v760, 7
        %v762 = vsub.s32 4, %v761
        %v763 = vrot.slane %v373, %v762
        %v764 = vlaneseq
        %v765 = vshrl.u32 %v764, 7
        %v766 = vsub.s32 5, %v765
        %v767 = vrot.slane %v373, %v766
        %v768 = vlaneseq
        %v769 = vshrl.u32 %v768, 7
        %v770 = vsub.s32 6, %v769
        %v771 = vrot.slane %v373, %v770
        %v772 = vlaneseq
        %v773 = vshrl.u32 %v772, 7
        %v774 = vsub.s32 7, %v773
        %v775 = vrot.slane %v373, %v774
        %vm784 = vcmask 1040384
        %v785 = vsel %vm784, %v378, %v419
        %v786 = vsel %vm784, %v382, %v423
        %v787 = vsel %vm784, %v386, %v427
        %v788 = vsel %vm784, %v390, %v431
        %v789 = vsel %vm784, %v394, %v435
        %v790 = vsel %vm784, %v398, %v439
        %v791 = vsel %vm784, %v402, %v443
        %v792 = vsel %vm784, %v406, %v447
        %vm793 = vcmask 1041408
        %v794 = vsel %vm793, %v785, %v460
        %v795 = vsel %vm793, %v786, %v464
        %v796 = vsel %vm793, %v787, %v468
        %v797 = vsel %vm793, %v788, %v472
        %v798 = vsel %vm793, %v789, %v476
        %v799 = vsel %vm793, %v790, %v480
        %v800 = vsel %vm793, %v791, %v484
        %v801 = vsel %vm793, %v792, %v488
        %vm802 = vcmask 1042432
        %v803 = vsel %vm802, %v794, %v501
        %v804 = vsel %vm802, %v795, %v505
        %v805 = vsel %vm802, %v796, %v509
        %v806 = vsel %vm802, %v797, %v513
        %v807 = vsel %vm802, %v798, %v517
        %v808 = vsel %vm802, %v799, %v521
        %v809 = vsel %vm802, %v800, %v525
        %v810 = vsel %vm802, %v801, %v529
        %vm811 = vcmask 1043456
        %v812 = vsel %vm811, %v803, %v542
        %v813 = vsel %vm811, %v804, %v546
        %v814 = vsel %vm811, %v805, %v550
        %v815 = vsel %vm811, %v806, %v554
        %v816 = vsel %vm811, %v807, %v558
        %v817 = vsel %vm811, %v808, %v562
        %v818 = vsel %vm811, %v809, %v566
        %v819 = vsel %vm811, %v810, %v570
        %vm820 = vcmask 1044480
        %v821 = vsel %vm820, %v812, %v583
        %v822 = vsel %vm820, %v813, %v587
        %v823 = vsel %vm820, %v814, %v591
        %v824 = vsel %vm820, %v815, %v595
        %v825 = vsel %vm820, %v816, %v599
        %v826 = vsel %vm820, %v817, %v603
        %v827 = vsel %vm820, %v818, %v607
        %v828 = vsel %vm820, %v819, %v611
        %vm829 = vcmask 1045504
        %v830 = vsel %vm829, %v821, %v624
        %v831 = vsel %vm829, %v822, %v628
        %v832 = vsel %vm829, %v823, %v632
        %v833 = vsel %vm829, %v824, %v636
        %v834 = vsel %vm829, %v825, %v640
        %v835 = vsel %vm829, %v826, %v644
        %v836 = vsel %vm829, %v827, %v648
        %v837 = vsel %vm829, %v828, %v652
        %vm838 = vcmask 1046528
        %v839 = vsel %vm838, %v830, %v665
        %v840 = vsel %vm838, %v831, %v669
        %v841 = vsel %vm838, %v832, %v673
        %v842 = vsel %vm838, %v833, %v677
        %v843 = vsel %vm838, %v834, %v681
        %v844 = vsel %vm838, %v835, %v685
        %v845 = vsel %vm838, %v836, %v689
        %v846 = vsel %vm838, %v837, %v693
        %v847 = vsel %vm784, %v706, %v747
        %v848 = vsel %vm784, %v710, %v751
        %v849 = vsel %vm784, %v714, %v755
        %v850 = vsel %vm784, %v718, %v759
        %v851 = vsel %vm784, %v722, %v763
        %v852 = vsel %vm784, %v726, %v767
        %v853 = vsel %vm784, %v730, %v771
        %v854 = vsel %vm784, %v734, %v775
        %v855 = vsel %vm793, %v847, 1.0
        %v856 = vsel %vm793, %v848, 1.0
        %v857 = vsel %vm793, %v849, 1.0
        %v858 = vsel %vm793, %v850, 1.0
        %v859 = vsel %vm793, %v851, 1.0
        %v860 = vsel %vm793, %v852, 1.0
        %v861 = vsel %vm793, %v853, 1.0
        %v862 = vsel %vm793, %v854, 1.0
        %v863 = vld [vmem:[%s1] sm:$0xff]
        %v864 = vld [vmem:[%s1 + $0x8] sm:$0xff]
        %v865 = vld [vmem:[%s1 + $0x10] sm:$0xff]
        %v866 = vld [vmem:[%s1 + $0x18] sm:$0xff]
        %vm867 = vcmask 89088
        %v869 = vsel %vm867, %v863, 0
        %v872 = vsel %vm867, %v864, 0
        %v875 = vsel %vm867, %v865, 0
        %v878 = vsel %vm867, %v866, 0
        %v881 = vsel %vm802, %v855, 0
        %v884 = vsel %vm802, %v856, 0
        %v887 = vsel %vm802, %v857, 0
        %v890 = vsel %vm802, %v858, 0
        %v893 = vsel %vm802, %v859, 0
        %v896 = vsel %vm802, %v860, 0
        %v899 = vsel %vm802, %v861, 0
        %v902 = vsel %vm802, %v862, 0
        %904 = vmatprep.subr.mxu0 0.0
        %905 = vmatpush1.msra.mxu0 0.0
        %906 = vmatprep.subr.mxu0 0.0
        %907 = vmatpush1.msra.mxu0 0.0
        %908 = vmatprep.subr.mxu0 0.0
        %909 = vmatpush1.msra.mxu0 0.0
        %910 = vmatprep.subr.mxu0 0.0
        %911 = vmatpush1.msra.mxu0 0.0
        %912 = vmatprep.subr.mxu0 0.0
        %913 = vmatpush1.msra.mxu0 0.0
        %914 = vmatprep.subr.mxu0 0.0
        %915 = vmatpush1.msra.mxu0 0.0
        %916 = vmatprep.subr.mxu0 0.0
        %917 = vmatpush1.msra.mxu0 0.0
        %918 = vmatprep.subr.mxu0 0.0
        %919 = vmatpush1.msra.mxu0 0.0
        %920 = vmatprep.subr.mxu0 0.0
        %921 = vmatpush1.msra.mxu0 0.0
        %922 = vmatprep.subr.mxu0 0.0
        %923 = vmatpush1.msra.mxu0 0.0
        %924 = vmatprep.subr.mxu0 0.0
        %925 = vmatpush1.msra.mxu0 0.0
        %926 = vmatprep.subr.mxu0 0.0
        %927 = vmatpush1.msra.mxu0 0.0
        %928 = vmatprep.subr.mxu0 0.0
        %929 = vmatpush1.msra.mxu0 0.0
        %930 = vmatprep.subr.mxu0 0.0
        %931 = vmatpush1.msra.mxu0 0.0
        %932 = vmatprep.subr.mxu0 %v884
        %933 = vmatpush1.msra.mxu0 %v881
        %934 = vmatprep.subr.mxu0 %v840
        %935 = vmatpush1.msra.mxu0 %v839
        %936 = vmatprep.subr.mxu0 0.0
        %937 = vmatpush2.msra.mxu0 0.0
        %938 = vmatprep.subr.mxu0 0.0
        %939 = vmatpush2.msra.mxu0 0.0
        %940 = vmatprep.subr.mxu0 0.0
        %941 = vmatpush2.msra.mxu0 0.0
        %942 = vmatprep.subr.mxu0 0.0
        %943 = vmatpush2.msra.mxu0 0.0
        %944 = vmatprep.subr.mxu0 0.0
        %945 = vmatpush2.msra.mxu0 0.0
        %946 = vmatprep.subr.mxu0 0.0
        %947 = vmatpush2.msra.mxu0 0.0
        %948 = vmatprep.subr.mxu0 0.0
        %949 = vmatpush2.msra.mxu0 0.0
        %950 = vmatprep.subr.mxu0 0.0
        %951 = vmatpush2.msra.mxu0 0.0
        %952 = vmatprep.subr.mxu0 0.0
        %953 = vmatpush2.msra.mxu0 0.0
        %954 = vmatprep.subr.mxu0 0.0
        %955 = vmatpush2.msra.mxu0 0.0
        %956 = vmatprep.subr.mxu0 0.0
        %957 = vmatpush2.msra.mxu0 0.0
        %958 = vmatprep.subr.mxu0 0.0
        %959 = vmatpush2.msra.mxu0 0.0
        %960 = vmatprep.subr.mxu0 0.0
        %961 = vmatpush2.msra.mxu0 0.0
        %962 = vmatprep.subr.mxu0 0.0
        %963 = vmatpush2.msra.mxu0 0.0
        %964 = vmatprep.subr.mxu0 0.0
        %965 = vmatpush2.msra.mxu0 0.0
        %966 = vmatprep.subr.mxu0 0.0
        %967 = vmatpush2.msra.mxu0 0.0
        %968 = vmatprep.mubr.f32.mxu0 0.0
        %969 = vmatmul.mubr.f32.gmra.mxu0 %v869
        %v970 = vpop.f32.mrf.mxu0
        %v971 = vadd.f32 0.0, %v970
        %v972 = vpop.f32.mrf.mxu0
        %v973 = vadd.f32 0.0, %v972
        %974 = vmatprep.mubr.f32.mxu0 0.0
        %975 = vmatmul.mubr.f32.gmra.mxu0 %v872
        %v976 = vpop.f32.mrf.mxu0
        %v977 = vadd.f32 0.0, %v976
        %v978 = vpop.f32.mrf.mxu0
        %v979 = vadd.f32 0.0, %v978
        %980 = vmatprep.mubr.f32.mxu0 0.0
        %981 = vmatmul.mubr.f32.gmra.mxu0 %v875
        %v982 = vpop.f32.mrf.mxu0
        %v983 = vadd.f32 0.0, %v982
        %v984 = vpop.f32.mrf.mxu0
        %v985 = vadd.f32 0.0, %v984
        %986 = vmatprep.mubr.f32.mxu0 0.0
        %987 = vmatmul.mubr.f32.gmra.mxu0 %v878
        %v988 = vpop.f32.mrf.mxu0
        %v989 = vadd.f32 0.0, %v988
        %v990 = vpop.f32.mrf.mxu0
        %v991 = vadd.f32 0.0, %v990
        %992 = vdwg.mxu0
        %993 = vmatprep.subr.mxu0 0.0
        %994 = vmatpush1.msra.mxu0 0.0
        %995 = vmatprep.subr.mxu0 0.0
        %996 = vmatpush1.msra.mxu0 0.0
        %997 = vmatprep.subr.mxu0 0.0
        %998 = vmatpush1.msra.mxu0 0.0
        %999 = vmatprep.subr.mxu0 0.0
        %1000 = vmatpush1.msra.mxu0 0.0
        %1001 = vmatprep.subr.mxu0 0.0
        %1002 = vmatpush1.msra.mxu0 0.0
        %1003 = vmatprep.subr.mxu0 0.0
        %1004 = vmatpush1.msra.mxu0 0.0
        %1005 = vmatprep.subr.mxu0 0.0
        %1006 = vmatpush1.msra.mxu0 0.0
        %1007 = vmatprep.subr.mxu0 0.0
        %1008 = vmatpush1.msra.mxu0 0.0
        %1009 = vmatprep.subr.mxu0 0.0
        %1010 = vmatpush1.msra.mxu0 0.0
        %1011 = vmatprep.subr.mxu0 0.0
        %1012 = vmatpush1.msra.mxu0 0.0
        %1013 = vmatprep.subr.mxu0 0.0
        %1014 = vmatpush1.msra.mxu0 0.0
        %1015 = vmatprep.subr.mxu0 0.0
        %1016 = vmatpush1.msra.mxu0 0.0
        %1017 = vmatprep.subr.mxu0 0.0
        %1018 = vmatpush1.msra.mxu0 0.0
        %1019 = vmatprep.subr.mxu0 0.0
        %1020 = vmatpush1.msra.mxu0 0.0
        %1021 = vmatprep.subr.mxu0 %v890
        %1022 = vmatpush1.msra.mxu0 %v887
        %1023 = vmatprep.subr.mxu0 %v842
        %1024 = vmatpush1.msra.mxu0 %v841
        %1025 = vmatprep.subr.mxu0 0.0
        %1026 = vmatpush2.msra.mxu0 0.0
        %1027 = vmatprep.subr.mxu0 0.0
        %1028 = vmatpush2.msra.mxu0 0.0
        %1029 = vmatprep.subr.mxu0 0.0
        %1030 = vmatpush2.msra.mxu0 0.0
        %1031 = vmatprep.subr.mxu0 0.0
        %1032 = vmatpush2.msra.mxu0 0.0
        %1033 = vmatprep.subr.mxu0 0.0
        %1034 = vmatpush2.msra.mxu0 0.0
        %1035 = vmatprep.subr.mxu0 0.0
        %1036 = vmatpush2.msra.mxu0 0.0
        %1037 = vmatprep.subr.mxu0 0.0
        %1038 = vmatpush2.msra.mxu0 0.0
        %1039 = vmatprep.subr.mxu0 0.0
        %1040 = vmatpush2.msra.mxu0 0.0
        %1041 = vmatprep.subr.mxu0 0.0
        %1042 = vmatpush2.msra.mxu0 0.0
        %1043 = vmatprep.subr.mxu0 0.0
        %1044 = vmatpush2.msra.mxu0 0.0
        %1045 = vmatprep.subr.mxu0 0.0
        %1046 = vmatpush2.msra.mxu0 0.0
        %1047 = vmatprep.subr.mxu0 0.0
        %1048 = vmatpush2.msra.mxu0 0.0
        %1049 = vmatprep.subr.mxu0 0.0
        %1050 = vmatpush2.msra.mxu0 0.0
        %1051 = vmatprep.subr.mxu0 0.0
        %1052 = vmatpush2.msra.mxu0 0.0
        %1053 = vmatprep.subr.mxu0 0.0
        %1054 = vmatpush2.msra.mxu0 0.0
        %1055 = vmatprep.subr.mxu0 0.0
        %1056 = vmatpush2.msra.mxu0 0.0
        %1057 = vmatprep.mubr.f32.mxu0 0.0
        %1058 = vmatmul.mubr.f32.gmra.mxu0 %v869
        %v1059 = vpop.f32.mrf.mxu0
        %v1060 = vadd.f32 0.0, %v1059
        %v1061 = vpop.f32.mrf.mxu0
        %v1062 = vadd.f32 0.0, %v1061
        %1063 = vmatprep.mubr.f32.mxu0 0.0
        %1064 = vmatmul.mubr.f32.gmra.mxu0 %v872
        %v1065 = vpop.f32.mrf.mxu0
        %v1066 = vadd.f32 0.0, %v1065
        %v1067 = vpop.f32.mrf.mxu0
        %v1068 = vadd.f32 0.0, %v1067
        %1069 = vmatprep.mubr.f32.mxu0 0.0
        %1070 = vmatmul.mubr.f32.gmra.mxu0 %v875
        %v1071 = vpop.f32.mrf.mxu0
        %v1072 = vadd.f32 0.0, %v1071
        %v1073 = vpop.f32.mrf.mxu0
        %v1074 = vadd.f32 0.0, %v1073
        %1075 = vmatprep.mubr.f32.mxu0 0.0
        %1076 = vmatmul.mubr.f32.gmra.mxu0 %v878
        %v1077 = vpop.f32.mrf.mxu0
        %v1078 = vadd.f32 0.0, %v1077
        %v1079 = vpop.f32.mrf.mxu0
        %v1080 = vadd.f32 0.0, %v1079
        %1081 = vdwg.mxu0
        %1082 = vmatprep.subr.mxu0 0.0
        %1083 = vmatpush1.msra.mxu0 0.0
        %1084 = vmatprep.subr.mxu0 0.0
        %1085 = vmatpush1.msra.mxu0 0.0
        %1086 = vmatprep.subr.mxu0 0.0
        %1087 = vmatpush1.msra.mxu0 0.0
        %1088 = vmatprep.subr.mxu0 0.0
        %1089 = vmatpush1.msra.mxu0 0.0
        %1090 = vmatprep.subr.mxu0 0.0
        %1091 = vmatpush1.msra.mxu0 0.0
        %1092 = vmatprep.subr.mxu0 0.0
        %1093 = vmatpush1.msra.mxu0 0.0
        %1094 = vmatprep.subr.mxu0 0.0
        %1095 = vmatpush1.msra.mxu0 0.0
        %1096 = vmatprep.subr.mxu0 0.0
        %1097 = vmatpush1.msra.mxu0 0.0
        %1098 = vmatprep.subr.mxu0 0.0
        %1099 = vmatpush1.msra.mxu0 0.0
        %1100 = vmatprep.subr.mxu0 0.0
        %1101 = vmatpush1.msra.mxu0 0.0
        %1102 = vmatprep.subr.mxu0 0.0
        %1103 = vmatpush1.msra.mxu0 0.0
        %1104 = vmatprep.subr.mxu0 0.0
        %1105 = vmatpush1.msra.mxu0 0.0
        %1106 = vmatprep.subr.mxu0 0.0
        %1107 = vmatpush1.msra.mxu0 0.0
        %1108 = vmatprep.subr.mxu0 0.0
        %1109 = vmatpush1.msra.mxu0 0.0
        %1110 = vmatprep.subr.mxu0 %v896
        %1111 = vmatpush1.msra.mxu0 %v893
        %1112 = vmatprep.subr.mxu0 %v844
        %1113 = vmatpush1.msra.mxu0 %v843
        %1114 = vmatprep.subr.mxu0 0.0
        %1115 = vmatpush2.msra.mxu0 0.0
        %1116 = vmatprep.subr.mxu0 0.0
        %1117 = vmatpush2.msra.mxu0 0.0
        %1118 = vmatprep.subr.mxu0 0.0
        %1119 = vmatpush2.msra.mxu0 0.0
        %1120 = vmatprep.subr.mxu0 0.0
        %1121 = vmatpush2.msra.mxu0 0.0
        %1122 = vmatprep.subr.mxu0 0.0
        %1123 = vmatpush2.msra.mxu0 0.0
        %1124 = vmatprep.subr.mxu0 0.0
        %1125 = vmatpush2.msra.mxu0 0.0
        %1126 = vmatprep.subr.mxu0 0.0
        %1127 = vmatpush2.msra.mxu0 0.0
        %1128 = vmatprep.subr.mxu0 0.0
        %1129 = vmatpush2.msra.mxu0 0.0
        %1130 = vmatprep.subr.mxu0 0.0
        %1131 = vmatpush2.msra.mxu0 0.0
        %1132 = vmatprep.subr.mxu0 0.0
        %1133 = vmatpush2.msra.mxu0 0.0
        %1134 = vmatprep.subr.mxu0 0.0
        %1135 = vmatpush2.msra.mxu0 0.0
        %1136 = vmatprep.subr.mxu0 0.0
        %1137 = vmatpush2.msra.mxu0 0.0
        %1138 = vmatprep.subr.mxu0 0.0
        %1139 = vmatpush2.msra.mxu0 0.0
        %1140 = vmatprep.subr.mxu0 0.0
        %1141 = vmatpush2.msra.mxu0 0.0
        %1142 = vmatprep.subr.mxu0 0.0
        %1143 = vmatpush2.msra.mxu0 0.0
        %1144 = vmatprep.subr.mxu0 0.0
        %1145 = vmatpush2.msra.mxu0 0.0
        %1146 = vmatprep.mubr.f32.mxu0 0.0
        %1147 = vmatmul.mubr.f32.gmra.mxu0 %v869
        %v1148 = vpop.f32.mrf.mxu0
        %v1149 = vadd.f32 0.0, %v1148
        %v1150 = vpop.f32.mrf.mxu0
        %v1151 = vadd.f32 0.0, %v1150
        %1152 = vmatprep.mubr.f32.mxu0 0.0
        %1153 = vmatmul.mubr.f32.gmra.mxu0 %v872
        %v1154 = vpop.f32.mrf.mxu0
        %v1155 = vadd.f32 0.0, %v1154
        %v1156 = vpop.f32.mrf.mxu0
        %v1157 = vadd.f32 0.0, %v1156
        %1158 = vmatprep.mubr.f32.mxu0 0.0
        %1159 = vmatmul.mubr.f32.gmra.mxu0 %v875
        %v1160 = vpop.f32.mrf.mxu0
        %v1161 = vadd.f32 0.0, %v1160
        %v1162 = vpop.f32.mrf.mxu0
        %v1163 = vadd.f32 0.0, %v1162
        %1164 = vmatprep.mubr.f32.mxu0 0.0
        %1165 = vmatmul.mubr.f32.gmra.mxu0 %v878
        %v1166 = vpop.f32.mrf.mxu0
        %v1167 = vadd.f32 0.0, %v1166
        %v1168 = vpop.f32.mrf.mxu0
        %v1169 = vadd.f32 0.0, %v1168
        %1170 = vdwg.mxu0
        %1171 = vmatprep.subr.mxu0 0.0
        %1172 = vmatpush1.msra.mxu0 0.0
        %1173 = vmatprep.subr.mxu0 0.0
        %1174 = vmatpush1.msra.mxu0 0.0
        %1175 = vmatprep.subr.mxu0 0.0
        %1176 = vmatpush1.msra.mxu0 0.0
        %1177 = vmatprep.subr.mxu0 0.0
        %1178 = vmatpush1.msra.mxu0 0.0
        %1179 = vmatprep.subr.mxu0 0.0
        %1180 = vmatpush1.msra.mxu0 0.0
        %1181 = vmatprep.subr.mxu0 0.0
        %1182 = vmatpush1.msra.mxu0 0.0
        %1183 = vmatprep.subr.mxu0 0.0
        %1184 = vmatpush1.msra.mxu0 0.0
        %1185 = vmatprep.subr.mxu0 0.0
        %1186 = vmatpush1.msra.mxu0 0.0
        %1187 = vmatprep.subr.mxu0 0.0
        %1188 = vmatpush1.msra.mxu0 0.0
        %1189 = vmatprep.subr.mxu0 0.0
        %1190 = vmatpush1.msra.mxu0 0.0
        %1191 = vmatprep.subr.mxu0 0.0
        %1192 = vmatpush1.msra.mxu0 0.0
        %1193 = vmatprep.subr.mxu0 0.0
        %1194 = vmatpush1.msra.mxu0 0.0
        %1195 = vmatprep.subr.mxu0 0.0
        %1196 = vmatpush1.msra.mxu0 0.0
        %1197 = vmatprep.subr.mxu0 0.0
        %1198 = vmatpush1.msra.mxu0 0.0
        %1199 = vmatprep.subr.mxu0 %v902
        %1200 = vmatpush1.msra.mxu0 %v899
        %1201 = vmatprep.subr.mxu0 %v846
        %1202 = vmatpush1.msra.mxu0 %v845
        %1203 = vmatprep.subr.mxu0 0.0
        %1204 = vmatpush2.msra.mxu0 0.0
        %1205 = vmatprep.subr.mxu0 0.0
        %1206 = vmatpush2.msra.mxu0 0.0
        %1207 = vmatprep.subr.mxu0 0.0
        %1208 = vmatpush2.msra.mxu0 0.0
        %1209 = vmatprep.subr.mxu0 0.0
        %1210 = vmatpush2.msra.mxu0 0.0
        %1211 = vmatprep.subr.mxu0 0.0
        %1212 = vmatpush2.msra.mxu0 0.0
        %1213 = vmatprep.subr.mxu0 0.0
        %1214 = vmatpush2.msra.mxu0 0.0
        %1215 = vmatprep.subr.mxu0 0.0
        %1216 = vmatpush2.msra.mxu0 0.0
        %1217 = vmatprep.subr.mxu0 0.0
        %1218 = vmatpush2.msra.mxu0 0.0
        %1219 = vmatprep.subr.mxu0 0.0
        %1220 = vmatpush2.msra.mxu0 0.0
        %1221 = vmatprep.subr.mxu0 0.0
        %1222 = vmatpush2.msra.mxu0 0.0
        %1223 = vmatprep.subr.mxu0 0.0
        %1224 = vmatpush2.msra.mxu0 0.0
        %1225 = vmatprep.subr.mxu0 0.0
        %1226 = vmatpush2.msra.mxu0 0.0
        %1227 = vmatprep.subr.mxu0 0.0
        %1228 = vmatpush2.msra.mxu0 0.0
        %1229 = vmatprep.subr.mxu0 0.0
        %1230 = vmatpush2.msra.mxu0 0.0
        %1231 = vmatprep.subr.mxu0 0.0
        %1232 = vmatpush2.msra.mxu0 0.0
        %1233 = vmatprep.subr.mxu0 0.0
        %1234 = vmatpush2.msra.mxu0 0.0
        %1235 = vmatprep.mubr.f32.mxu0 0.0
        %1236 = vmatmul.mubr.f32.gmra.mxu0 %v869
        %v1237 = vpop.f32.mrf.mxu0
        %v1238 = vadd.f32 0.0, %v1237
        %v1239 = vpop.f32.mrf.mxu0
        %v1240 = vadd.f32 0.0, %v1239
        %1241 = vmatprep.mubr.f32.mxu0 0.0
        %1242 = vmatmul.mubr.f32.gmra.mxu0 %v872
        %v1243 = vpop.f32.mrf.mxu0
        %v1244 = vadd.f32 0.0, %v1243
        %v1245 = vpop.f32.mrf.mxu0
        %v1246 = vadd.f32 0.0, %v1245
        %1247 = vmatprep.mubr.f32.mxu0 0.0
        %1248 = vmatmul.mubr.f32.gmra.mxu0 %v875
        %v1249 = vpop.f32.mrf.mxu0
        %v1250 = vadd.f32 0.0, %v1249
        %v1251 = vpop.f32.mrf.mxu0
        %v1252 = vadd.f32 0.0, %v1251
        %1253 = vmatprep.mubr.f32.mxu0 0.0
        %1254 = vmatmul.mubr.f32.gmra.mxu0 %v878
        %v1255 = vpop.f32.mrf.mxu0
        %v1256 = vadd.f32 0.0, %v1255
        %v1257 = vpop.f32.mrf.mxu0
        %v1258 = vadd.f32 0.0, %v1257
        %1259 = vdwg.mxu0
        %1260 = vst [vmem:[%s135] sm:$0xff] %v971
        %1261 = vst [vmem:[%s135 + $0x8] sm:$0xff] %v973
        %1262 = vst [vmem:[%s135 + $0x10] sm:$0xff] %v1060
        %1263 = vst [vmem:[%s135 + $0x18] sm:$0xff] %v1062
        %1264 = vst [vmem:[%s135 + $0x20] sm:$0xff] %v1149
        %1265 = vst [vmem:[%s135 + $0x28] sm:$0xff] %v1151
        %1266 = vst [vmem:[%s135 + $0x30] sm:$0xff] %v1238
        %1267 = vst [vmem:[%s135 + $0x38] sm:$0xff] %v1240
        %1268 = vst [vmem:[%s135 + $0x40] sm:$0xff] %v977
        %1269 = vst [vmem:[%s135 + $0x48] sm:$0xff] %v979
        %1270 = vst [vmem:[%s135 + $0x50] sm:$0xff] %v1066
        %1271 = vst [vmem:[%s135 + $0x58] sm:$0xff] %v1068
        %1272 = vst [vmem:[%s135 + $0x60] sm:$0xff] %v1155
        %1273 = vst [vmem:[%s135 + $0x68] sm:$0xff] %v1157
        %1274 = vst [vmem:[%s135 + $0x70] sm:$0xff] %v1244
        %1275 = vst [vmem:[%s135 + $0x78] sm:$0xff] %v1246
        %1276 = vst [vmem:[%s135 + $0x80] sm:$0xff] %v983
        %1277 = vst [vmem:[%s135 + $0x88] sm:$0xff] %v985
        %1278 = vst [vmem:[%s135 + $0x90] sm:$0xff] %v1072
        %1279 = vst [vmem:[%s135 + $0x98] sm:$0xff] %v1074
        %1280 = vst [vmem:[%s135 + $0xa0] sm:$0xff] %v1161
        %1281 = vst [vmem:[%s135 + $0xa8] sm:$0xff] %v1163
        %1282 = vst [vmem:[%s135 + $0xb0] sm:$0xff] %v1250
        %1283 = vst [vmem:[%s135 + $0xb8] sm:$0xff] %v1252
        %1284 = vst [vmem:[%s135 + $0xc0] sm:$0xff] %v989
        %1285 = vst [vmem:[%s135 + $0xc8] sm:$0xff] %v991
        %1286 = vst [vmem:[%s135 + $0xd0] sm:$0xff] %v1078
        %1287 = vst [vmem:[%s135 + $0xd8] sm:$0xff] %v1080
        %1288 = vst [vmem:[%s135 + $0xe0] sm:$0xff] %v1167
        %1289 = vst [vmem:[%s135 + $0xe8] sm:$0xff] %v1169
        %1290 = vst [vmem:[%s135 + $0xf0] sm:$0xff] %v1256
        %1291 = vst [vmem:[%s135 + $0xf8] sm:$0xff] %v1258
        %s1292 = sand.u32 %s71, 1
        %s1293 = scalar_lea.sflag [#allocation3], %s1292
        %s1294 = sand.u32 %s71, 1
        %s1295 = smul.addr %s1294, 256
        %s1296 = scalar_lea.vmem [#allocation2], %s1295
        // Predicated region
        $region29: #{tpu_custom_call.1} parent=27 // pred_check
          %p1297 = pneg %p81
        $region30: #{tpu_custom_call.1} parent=27 // pred_check_branch
          %1299 = sbr.rel (%p1297) target = $region32
        $region31: #{tpu_custom_call.1} parent=27 // pred_region
          %s1300 = smul.u32 8, %s16
          %s1302 = ssub.s32 4096, 4096
          %1303 = vsyncadd %s1293, %s1302
          %s1304 = smul.addr %s1300, 128
          %s1305 = scalar_lea.hbm %s2, %s1304
          %s1306 = sshll.u32 %s1296, 4
          %s1307 = int_to_ptr.vmem [resolvable:$true] %s1306
          %1312 = dma.vmem_to_hbm [thread:$0]  %s1307, 4096, %s1305, %s1293, 1024, 2048, 64
        $region32: #{tpu_custom_call.1} parent=27 // pred_fallthru
          _
      $region28: #{tpu_custom_call.1} parent=5 // pred_fallthru
        _
      %p1313 = scmp.le.s32.totalorder 2, %s11
      // Predicated region
      $region33: #{tpu_custom_call.1} parent=5 // pred_check
        %p1314 = pneg %p1313
      $region34: #{tpu_custom_call.1} parent=5 // pred_check_branch
        %1316 = sbr.rel (%p1314) target = $region36
      $region35: #{tpu_custom_call.1} parent=5 // pred_region
        %s1317 = ssub.s32 %s11, 2
        // Predicated region
        $region37: #{tpu_custom_call.1} parent=35 // pred_check
          %p1318 = pneg %p87
        $region38: #{tpu_custom_call.1} parent=35 // pred_check_branch
          %1320 = sbr.rel (%p1318) target = $region40
        $region39: #{tpu_custom_call.1} parent=35 // pred_region
          %s1321 = sand.u32 %s72, 1
          %s1322 = scalar_lea.sflag [#allocation3], %s1321
          %s1323 = sand.u32 %s72, 1
          %s1324 = smul.addr %s1323, 256
          %s1325 = scalar_lea.vmem [#allocation2], %s1324
          %1326 = dma.done %s1322, 4096
        $region40: #{tpu_custom_call.1} parent=35 // pred_fallthru
          _
      $region36: #{tpu_custom_call.1} parent=5 // pred_fallthru
        _
    $region6: #{tpu_custom_call.1} parent=1 // loop_footer
      %s15 = sadd.s32 1, %s11
    $region7: #{tpu_custom_call.1} parent=1 // loop_footer_branch
      %10 = sbr.rel target = $region3
    $region8: #{tpu_custom_call.1} parent=1 // loop_exit
      _
    %1327 = vsyncpa [#allocation3], 1
    %s1328 = scalar_lea.sflag [#allocation3], 1
    %1329 = vsyncpa %s1328, 1

</llo_original>
